<compile_context>
chip_gen: v6e
topology: v6e:2x2x1
jax: 0.10.0
libtpu: 0.0.40
codegen_flags: <defaults>
</compile_context>

<pallas_src>
import functools

import jax
import jax.numpy as jnp
from jax.experimental import pallas as pl
from jax.experimental.pallas import tpu as pltpu


def _gelu_exact(x):
    # PyTorch default F.gelu is the exact erf-based formulation (f32 here).
    return 0.5 * x * (1.0 + jax.lax.erf(x * 0.7071067811865476))


def _round_up(x, m):
    return (x + m - 1) // m * m


def _cdiv(a, b):
    return (a + b - 1) // b


def _tpu_limits():
    """(usable_vmem_bytes, tensorcores_per_device) with safe fallbacks."""
    vmem_cap = 64 * 1024 * 1024          # conservative fallback: v7x per-TC VMEM
    n_cores = 2                          # conservative fallback: split the grid
    try:
        info = pltpu.get_tpu_info()
        cap = getattr(info, "vmem_capacity_bytes", None)
        if cap:
            vmem_cap = int(cap)
        cores = None
        for name in ("num_cores", "core_count", "num_tensorcores",
                     "tensorcore_count"):
            cores = getattr(info, name, None)
            if cores:
                break
        if cores:
            n_cores = int(cores)
        elif vmem_cap >= 100 * 1024 * 1024:
            n_cores = 1                  # v5e/v6e pattern: 128 MiB VMEM, 1 TC
    except Exception:
        pass
    # ~15% headroom for Mosaic-internal scratch / pipeline bookkeeping.
    return (vmem_cap * 85) // 100, max(1, n_cores)


def _vmem_bytes(tm, th, nk, dim_in, dim_out_p, x_isz, w_isz):
    """Estimated peak VMEM footprint of one kernel instance."""
    wbuf = 1 if nk == 1 else 2                        # streamed tiles dbl-buffer
    weights = ((dim_in * th + th * dim_out_p) * w_isz + th * w_isz) * wbuf
    weights += dim_out_p * w_isz                      # b2 (single buffer)
    io = 2 * tm * dim_in * x_isz + 2 * tm * dim_out_p * x_isz   # x/out tiles
    acc = tm * dim_out_p * 4                          # f32 accumulator scratch
    tmp = tm * th * 4                                 # f32 hidden chunk
    if w_isz < 4:
        tmp += tm * th * w_isz                        # cast copy for 2nd matmul
    tmp += tm * dim_out_p * 4                         # f32 out temp before cast
    return weights + io + acc + tmp


def _choose_tiles(M, dim_in, H, dim_out_p, x_isz, w_isz,
                  tm_hint, vmem_budget, n_cores):
    # Row alignment is dtype-aware: bf16 packs 16 rows per sublane group.
    row_align = 8 if x_isz >= 4 else (16 if x_isz == 2 else 32)
    if tm_hint is None:
        # Bigger default tiles where VMEM allows (v5e/v6e 128 MiB class).
        tm_hint = 512 if vmem_budget >= 80 * 1024 * 1024 else 256
    tm = max(row_align, min(_round_up(tm_hint, row_align),
                            _round_up(M, row_align)))
    if n_cores > 1:
        # Keep an even number of row steps so both TensorCores get work.
        steps = _cdiv(M, tm)
        if steps == 1 and M >= 2 * row_align:
            steps = 2
        elif steps > 1 and steps % 2:
            steps += 1
        tm = max(row_align, _round_up(_cdiv(M, steps), row_align))

    # Hidden tile: full residency if it fits the VMEM budget, otherwise stream
    # exact divisors of H that are multiples of 128 (th | H keeps the
    # accumulation exact -- no masking of partial hidden chunks needed).
    th_candidates = [H]
    d = (H // 128) * 128
    while d >= 128:
        if d < H and H % d == 0:
            th_candidates.append(d)
        d -= 128

    th = th_candidates[0]
    for cand in th_candidates:
        if _vmem_bytes(tm, cand, _cdiv(H, cand), dim_in, dim_out_p,
                       x_isz, w_isz) <= vmem_budget:
            th = cand
            break
    else:
        th = th_candidates[-1]
        while tm > row_align and _vmem_bytes(
                tm, th, _cdiv(H, th), dim_in, dim_out_p,
                x_isz, w_isz) > vmem_budget:
            tm = max(row_align, _round_up(tm // 2, row_align))
    return tm, th


def _spec(shape, index_map, *, single_buffer=False):
    """BlockSpec; single-buffer constant-index blocks when supported."""
    if single_buffer:
        try:
            return pl.BlockSpec(shape, index_map, pipeline_mode=pl.Buffered(1))
        except Exception:
            pass  # older jax: fall back to default double-buffering
    return pl.BlockSpec(shape, index_map)


def mlp_kernel(x_ref, w1_ref, b1_ref, w2_ref, b2_ref, o_ref, acc_ref):
    k = pl.program_id(1)

    @pl.when(k == 0)
    def _init():
        acc_ref[...] = jnp.zeros_like(acc_ref)

    # Linear 1 chunk (MXU, f32 accumulation) + bias + exact GELU, all in f32.
    h = jnp.dot(x_ref[...], w1_ref[...], preferred_element_type=jnp.float32)
    h = h + b1_ref[...].astype(jnp.float32)            # (TM, TH) + (1, TH)
    h = _gelu_exact(h)

    # Linear 2 partial product for this hidden chunk, accumulated in f32.
    acc_ref[...] += jnp.dot(h.astype(w2_ref.dtype), w2_ref[...],
                            preferred_element_type=jnp.float32)

    @pl.when(k == pl.num_programs(1) - 1)
    def _finalize():
        o_ref[...] = (acc_ref[...]
                      + b2_ref[...].astype(jnp.float32)).astype(o_ref.dtype)


def prepare_mlp_params(w1, b1, w2, b2):
    """One-time parameter packing (keep out of the per-call path):
    biases become (1, .) rows; W2/b2 are zero-padded so the output's last dim
    is a multiple of 128 (unmasked full-lane stores in the kernel).
    Returns (params, dim_out) where dim_out is the un-padded output width."""
    dim_out = int(w2.shape[1])
    dim_out_p = _round_up(dim_out, 128)
    if dim_out_p != dim_out:
        w2 = jnp.pad(w2, ((0, 0), (0, dim_out_p - dim_out)))
        b2 = jnp.pad(b2, ((0, dim_out_p - dim_out),))
    return (w1, b1.reshape(1, -1), w2, b2.reshape(1, -1)), dim_out


@functools.partial(jax.jit, static_argnames=("dim_out", "tm"))
def mlp_forward(x, params, *, dim_out, tm=None):
    """x: (B, N, dim_in) -> (B, N, dim_out). params from prepare_mlp_params."""
    w1, b1_2d, w2, b2_2d = params
    B, N, dim_in = x.shape
    dim_hidden = w1.shape[1]
    dim_out_p = w2.shape[1]
    assert dim_out_p % 128 == 0 and dim_out <= dim_out_p
    M = B * N
    x2d = x.reshape(M, dim_in)

    x_isz = x.dtype.itemsize
    w_isz = w1.dtype.itemsize
    vmem_budget, n_cores = _tpu_limits()
    tm_eff, th = _choose_tiles(M, dim_in, dim_hidden, dim_out_p,
                               x_isz, w_isz, tm, vmem_budget, n_cores)
    assert dim_hidden % th == 0
    nk = dim_hidden // th
    grid = (_cdiv(M, tm_eff), nk)

    est = _vmem_bytes(tm_eff, th, nk, dim_in, dim_out_p, x_isz, w_isz)
    vmem_limit = int(min(max(int(est * 1.2), 32 * 1024 * 1024), vmem_budget))

    flops = 2 * M * (dim_in * dim_hidden + dim_hidden * dim_out_p)
    transcendentals = M * dim_hidden  # one erf per hidden activation
    weight_bytes = (dim_in * dim_hidden + dim_hidden * dim_out_p
                    + dim_hidden + dim_out_p) * w_isz
    bytes_accessed = ((M * dim_in + M * dim_out_p) * x_isz
                      + weight_bytes * (grid[0] if nk > 1 else 1))

    resident = nk == 1   # constant-index weight blocks: single-buffer them
    out2d = pl.pallas_call(
        mlp_kernel,
        out_shape=jax.ShapeDtypeStruct((M, dim_out_p), x.dtype),
        grid=grid,
        in_specs=[
            pl.BlockSpec((tm_eff, dim_in), lambda i, k: (i, 0)),             # x
            _spec((dim_in, th), lambda i, k: (0, k), single_buffer=resident),     # W1
            _spec((1, th), lambda i, k: (0, k), single_buffer=resident),          # b1
            _spec((th, dim_out_p), lambda i, k: (k, 0), single_buffer=resident),  # W2
            _spec((1, dim_out_p), lambda i, k: (0, 0), single_buffer=True),       # b2
        ],
        out_specs=pl.BlockSpec((tm_eff, dim_out_p), lambda i, k: (i, 0)),
        scratch_shapes=[pltpu.VMEM((tm_eff, dim_out_p), jnp.float32)],
        compiler_params=pltpu.CompilerParams(
            dimension_semantics=("parallel", "arbitrary"),
            vmem_limit_bytes=vmem_limit),
        cost_estimate=pl.CostEstimate(flops=flops,
                                      transcendentals=transcendentals,
                                      bytes_accessed=bytes_accessed),
    )(x2d, w1, b1_2d, w2, b2_2d)

    return out2d[:, :dim_out].reshape(B, N, dim_out)


def init_linear_params(key, fan_in, fan_out, dtype=jnp.float32):
    """Deterministic nn.Linear-style init: U(-1/sqrt(fan_in), 1/sqrt(fan_in)).
    Returns W pre-transposed to (fan_in, fan_out) plus bias (fan_out,)."""
    kw, kb = jax.random.split(key)
    bound = 1.0 / (fan_in ** 0.5)
    w = jax.random.uniform(kw, (fan_in, fan_out), dtype, -bound, bound)
    b = jax.random.uniform(kb, (fan_out,), dtype, -bound, bound)
    return w, b


if __name__ == "__main__":
    # Small shapes consistent with the module; dim_out=64 exercises the
    # lane-padding (output padded to 128 inside the kernel, sliced outside).
    batch, seq = 2, 8
    dim_in, dim_hidden, dim_out = 64, 256, 64

    key = jax.random.PRNGKey(0)
    kx, k1, k2 = jax.random.split(key, 3)

    x = jax.random.normal(kx, (batch, seq, dim_in), jnp.float32)
    w1, b1 = init_linear_params(k1, dim_in, dim_hidden)
    w2, b2 = init_linear_params(k2, dim_hidden, dim_out)

    # Pure-JAX reference (same math as the PyTorch forward, p=0 dropout).
    h_ref = x @ w1 + b1
    h_ref = 0.5 * h_ref * (1.0 + jax.lax.erf(h_ref / jnp.sqrt(2.0)))
    ref = h_ref @ w2 + b2

    # One-time parameter packing (padding stays out of the per-call path).
    params_f32, d_out = prepare_mlp_params(w1, b1, w2, b2)
    out = jax.block_until_ready(mlp_forward(x, params_f32, dim_out=d_out))
    assert out.shape == (batch, seq, dim_out)
    assert jnp.allclose(out, ref, atol=1e-5, rtol=1e-5), "f32 mismatch vs reference"

    # bf16 MXU fast path (weights/activations bf16; f32 accumulation and f32
    # GELU stay inside the kernel). Looser tolerance from bf16 rounding.
    to_bf16 = lambda a: a.astype(jnp.bfloat16)
    params_bf16, _ = prepare_mlp_params(to_bf16(w1), to_bf16(b1),
                                        to_bf16(w2), to_bf16(b2))
    out_bf16 = jax.block_until_ready(
        mlp_forward(to_bf16(x), params_bf16, dim_out=d_out))
    assert out_bf16.shape == (batch, seq, dim_out)
    assert jnp.allclose(out_bf16.astype(jnp.float32), ref,
                        atol=5e-2, rtol=5e-2), "bf16 mismatch vs reference"

    print("KERNEL_OK")
</pallas_src>

<mosaic_0001>
module attributes {stable_mosaic.version = 11 : i64} {
  func.func @mlp_kernel(%arg0: i32, %arg1: i32, %arg2: memref<8x64xf32, #tpu.memory_space<vmem>>, %arg3: memref<64x256xf32, #tpu.memory_space<vmem>>, %arg4: memref<1x256xf32, #tpu.memory_space<vmem>>, %arg5: memref<256x128xf32, #tpu.memory_space<vmem>>, %arg6: memref<1x128xf32, #tpu.memory_space<vmem>>, %arg7: memref<8x128xf32, #tpu.memory_space<vmem>>, %arg8: memref<8x128xf32, #tpu.memory_space<vmem>>) attributes {dimension_semantics = [#tpu.dimension_semantics<parallel>, #tpu.dimension_semantics<arbitrary>], iteration_bounds = array<i64: 2, 1>, scalar_prefetch = 0 : i64, scratch_operands = 1 : i64, tpu.core_type = #tpu.core_type<tc>, window_params = [{transform_indices = @transform_0, window_bounds = array<i64: 8, 64>}, {pipeline_mode = #tpu.pipeline_mode<synchronous>, transform_indices = @transform_1, window_bounds = array<i64: 64, 256>}, {pipeline_mode = #tpu.pipeline_mode<synchronous>, transform_indices = @transform_2, window_bounds = array<i64: 1, 256>}, {pipeline_mode = #tpu.pipeline_mode<synchronous>, transform_indices = @transform_3, window_bounds = array<i64: 256, 128>}, {pipeline_mode = #tpu.pipeline_mode<synchronous>, transform_indices = @transform_4, window_bounds = array<i64: 1, 128>}, {transform_indices = @transform_5, window_bounds = array<i64: 8, 128>}]} {
    %c0_i32 = arith.constant 0 : i32
    %0 = arith.cmpi eq, %arg1, %c0_i32 : i32
    %1 = arith.extui %0 : i1 to i32
    %c0_i32_0 = arith.constant 0 : i32
    %2 = arith.cmpi ne, %1, %c0_i32_0 : i32
    scf.if %2 {
      %cst_18 = arith.constant 0.000000e+00 : f32
      %25 = vector.broadcast %cst_18 : f32 to vector<8x128xf32>
      %c0_19 = arith.constant 0 : index
      %c0_20 = arith.constant 0 : index
      %26 = vector.load %arg8[%c0_19, %c0_20] : memref<8x128xf32, #tpu.memory_space<vmem>>, vector<8x128xf32>
      tpu.vector_store %arg8[%c0_19, %c0_20], %25 {strides = array<i32>} : memref<8x128xf32, #tpu.memory_space<vmem>>, vector<8x128xf32>,
    } else {
    }
    %c0 = arith.constant 0 : index
    %c0_1 = arith.constant 0 : index
    %3 = vector.load %arg2[%c0, %c0_1] : memref<8x64xf32, #tpu.memory_space<vmem>>, vector<8x64xf32>
    %c0_2 = arith.constant 0 : index
    %c0_3 = arith.constant 0 : index
    %4 = vector.load %arg3[%c0_2, %c0_3] : memref<64x256xf32, #tpu.memory_space<vmem>>, vector<64x256xf32>
    %cst = arith.constant dense<0.000000e+00> : vector<8x256xf32>
    %5 = tpu.matmul %3, %4, %cst {dimension_numbers = #tpu.dot_dimension_numbers<[1], [0], [0], [1], [0, 0, 1, 1], [], []>} : vector<8x64xf32>, vector<64x256xf32>, vector<8x256xf32> -> vector<8x256xf32>
    %c0_4 = arith.constant 0 : index
    %c0_5 = arith.constant 0 : index
    %6 = vector.load %arg4[%c0_4, %c0_5] : memref<1x256xf32, #tpu.memory_space<vmem>>, vector<1x256xf32>
    %7 = vector.broadcast %6 : vector<1x256xf32> to vector<8x256xf32>
    %8 = arith.addf %5, %7 : vector<8x256xf32>
    %cst_6 = arith.constant 5.000000e-01 : f32
    %9 = vector.broadcast %cst_6 : f32 to vector<8x256xf32>
    %10 = arith.mulf %9, %8 : vector<8x256xf32>
    %cst_7 = arith.constant 0.707106769 : f32
    %11 = vector.broadcast %cst_7 : f32 to vector<8x256xf32>
    %12 = arith.mulf %8, %11 : vector<8x256xf32>
    %13 = math.erf %12 : vector<8x256xf32>
    %cst_8 = arith.constant 1.000000e+00 : f32
    %14 = vector.broadcast %cst_8 : f32 to vector<8x256xf32>
    %15 = arith.addf %14, %13 : vector<8x256xf32>
    %16 = arith.mulf %10, %15 : vector<8x256xf32>
    %c0_9 = arith.constant 0 : index
    %c0_10 = arith.constant 0 : index
    %17 = vector.load %arg8[%c0_9, %c0_10] : memref<8x128xf32, #tpu.memory_space<vmem>>, vector<8x128xf32>
    %c0_11 = arith.constant 0 : index
    %c0_12 = arith.constant 0 : index
    %18 = vector.load %arg5[%c0_11, %c0_12] : memref<256x128xf32, #tpu.memory_space<vmem>>, vector<256x128xf32>
    %cst_13 = arith.constant dense<0.000000e+00> : vector<8x128xf32>
    %19 = tpu.matmul %16, %18, %cst_13 {dimension_numbers = #tpu.dot_dimension_numbers<[1], [0], [0], [1], [0, 0, 1, 1], [], []>} : vector<8x256xf32>, vector<256x128xf32>, vector<8x128xf32> -> vector<8x128xf32>
    %20 = arith.addf %17, %19 : vector<8x128xf32>
    %c0_14 = arith.constant 0 : index
    %c0_15 = arith.constant 0 : index
    %21 = vector.load %arg8[%c0_14, %c0_15] : memref<8x128xf32, #tpu.memory_space<vmem>>, vector<8x128xf32>
    tpu.vector_store %arg8[%c0_14, %c0_15], %20 {strides = array<i32>} : memref<8x128xf32, #tpu.memory_space<vmem>>, vector<8x128xf32>,
    %c0_i32_16 = arith.constant 0 : i32
    %22 = arith.cmpi eq, %arg1, %c0_i32_16 : i32
    %23 = arith.extui %22 : i1 to i32
    %c0_i32_17 = arith.constant 0 : i32
    %24 = arith.cmpi ne, %23, %c0_i32_17 : i32
    scf.if %24 {
      %c0_18 = arith.constant 0 : index
      %c0_19 = arith.constant 0 : index
      %25 = vector.load %arg8[%c0_18, %c0_19] : memref<8x128xf32, #tpu.memory_space<vmem>>, vector<8x128xf32>
      %c0_20 = arith.constant 0 : index
      %c0_21 = arith.constant 0 : index
      %26 = vector.load %arg6[%c0_20, %c0_21] : memref<1x128xf32, #tpu.memory_space<vmem>>, vector<1x128xf32>
      %27 = vector.broadcast %26 : vector<1x128xf32> to vector<8x128xf32>
      %28 = arith.addf %25, %27 : vector<8x128xf32>
      %c0_22 = arith.constant 0 : index
      %c0_23 = arith.constant 0 : index
      %29 = vector.load %arg7[%c0_22, %c0_23] : memref<8x128xf32, #tpu.memory_space<vmem>>, vector<8x128xf32>
      tpu.vector_store %arg7[%c0_22, %c0_23], %28 {strides = array<i32>} : memref<8x128xf32, #tpu.memory_space<vmem>>, vector<8x128xf32>,
    } else {
    }
    return
  }
  func.func @transform_0(%arg0: i32, %arg1: i32) -> (i32, i32) {
    %c0_i32 = arith.constant 0 : i32
    %c0_i32_0 = arith.constant 0 : i32
    return %arg0, %c0_i32 : i32, i32
  }
  func.func @transform_1(%arg0: i32, %arg1: i32) -> (i32, i32) {
    %c0_i32 = arith.constant 0 : i32
    %c0_i32_0 = arith.constant 0 : i32
    return %c0_i32, %arg1 : i32, i32
  }
  func.func @transform_2(%arg0: i32, %arg1: i32) -> (i32, i32) {
    %c0_i32 = arith.constant 0 : i32
    %c0_i32_0 = arith.constant 0 : i32
    return %c0_i32, %arg1 : i32, i32
  }
  func.func @transform_3(%arg0: i32, %arg1: i32) -> (i32, i32) {
    %c0_i32 = arith.constant 0 : i32
    %c0_i32_0 = arith.constant 0 : i32
    return %arg1, %c0_i32 : i32, i32
  }
  func.func @transform_4(%arg0: i32, %arg1: i32) -> (i32, i32) {
    %c0_i32 = arith.constant 0 : i32
    %c0_i32_0 = arith.constant 0 : i32
    %c0_i32_1 = arith.constant 0 : i32
    return %c0_i32, %c0_i32_0 : i32, i32
  }
  func.func @transform_5(%arg0: i32, %arg1: i32) -> (i32, i32) {
    %c0_i32 = arith.constant 0 : i32
    %c0_i32_0 = arith.constant 0 : i32
    return %arg0, %c0_i32 : i32, i32
  }
}

</mosaic_0001>

<llo_original>
// kernel: mlp_forward.1
$region0: #{mlp_forward.1}
  #allocation0 [shape = 'u32[]', space=smem, size = 0x4, offset = 0x4, fixed_abs, tag = 'smem constant byte address 0x4 - core index']
  #allocation1 [shape = 'u32[144,128]{1,0:T(1,128)}', space=vmem, size = 0x12000, scoped, tag = 'internal scratch']
  #allocation2 [shape = 'f32[8,128]{1,0:T(8,128)}', space=vmem, size = 0x1000, scoped, tag = 'scratch operand']
  %s0 = inlined_call_operand.hbm [shape: f32[16,64], index: 0, kind: input, shape index: {}]
  %s1 = inlined_call_operand.hbm [shape: f32[64,256], index: 1, kind: input, shape index: {}]
  %s2 = inlined_call_operand.vmem [shape: f32[1,256], index: 2, kind: input, shape index: {}]
  %s3 = inlined_call_operand.hbm [shape: f32[256,128], index: 3, kind: input, shape index: {}]
  %s4 = inlined_call_operand.vmem [shape: f32[1,128], index: 4, kind: input, shape index: {}]
  %s5 = inlined_call_operand.vmem [shape: f32[16,128], index: 5, kind: output, shape index: {}]
  %s6 = sld [smem:[#allocation0]]
  $region73: #{mlp_forward.1} parent=0
    _
  %s8 = ssub.s32 1, %s6
  %s9 = scalar_select 0, %s8, %s6
  $region1: #{mlp_forward.1} parent=0
    #allocation3 [shape = 'u8[8192]{0}', space=vmem, size = 0x2000, scoped, tag = 'input window, operand 0']
    #allocation4 [shape = 's32[2]{0}', space=sflag, size = 0x8, scoped, tag = 'scoped memory for mlp_forward.1']
    #allocation5 [shape = 'u8[65536]{0}', space=vmem, size = 0x10000, scoped, tag = 'input window, operand 1, single buffered']
    #allocation6 [shape = 's32[1]{0}', space=sflag, size = 0x4, scoped, tag = 'scoped memory for mlp_forward.1']
    #allocation7 [shape = 'u8[131072]{0}', space=vmem, size = 0x20000, scoped, tag = 'input window, operand 3, single buffered']
    %10 = vsyncpa [#allocation4], 0
    %s11 = scalar_lea.sflag [#allocation4], 1
    %12 = vsyncpa %s11, 0
    %13 = vsyncpa [#allocation6], 0
    loop: start=0, step=1, limit=4
    $region2: #{mlp_forward.1} parent=1 // loop_pre_header
      _
    $region3: #{mlp_forward.1} parent=1 // loop_header
      %s15 = sphi 0, %s19
      %p16 = scmp.ge.s32.totalorder %s15, 4
      %s22 = sphi 0, %s34
      %s23 = sphi 0, %s30
      %s24 = sphi 0, %s22
      %s25 = sphi 0, %s23
      %s26 = sphi 0, %s24
      %s27 = sphi 0, %s25
      %s37 = sphi 0, %s39
      %s40 = sphi 0, %s37
      %s41 = sphi 0, %s40
      %s57 = sphi 0, %s41
      %s63 = sphi 0, %s65
      %s66 = sphi 0, %s63
      %s67 = sphi 0, %s66
      %s83 = sphi 0, %s67
      %s89 = sphi 0, %s91
      %s92 = sphi 0, %s89
      %s93 = sphi 0, %s92
      %s109 = sphi 0, %s93
      %s115 = sphi 0, %s117
      %s118 = sphi 0, %s115
      %s119 = sphi 0, %s118
      %s135 = sphi 0, %s119
      %s139 = sphi 0, %s139
      %s141 = sphi 0, %s139
      %s142 = sphi 0, %s141
      %s156 = sphi 0, %s142
      %s162 = sphi 0, %s164
      %s165 = sphi 0, %s162
      %s166 = sphi 0, %s165
      %s182 = sphi 0, %s166
    $region4: #{mlp_forward.1} parent=1 // loop_header_branch
      %18 = sbr.rel (%p16) target = $region8
    $region5: #{mlp_forward.1} parent=1 // loop_body
      %s20 = ssub.s32 %s15, 1
      %s21 = ssub.s32 %s15, 2
      %s28 = sadd.s32 1, %s23
      %p29 = scmp.ge.s32.totalorder %s28, 1
      %s30 = scalar_select %p29, 0, %s28
      %s31 = sadd.s32 1, %s22
      %s32 = scalar_select %p29, %s31, %s22
      %p33 = scmp.ge.s32.totalorder %s32, 2
      %s34 = scalar_select %p33, 0, %s32
      %s35 = ssub.s32 %s22, %s34
      %p36 = scmp.eq.s32.totalorder %s35, 0
      %s38 = sadd.s32 %s37, 1
      %s39 = scalar_select %p36, %s37, %s38
      %p42 = pneg %p36
      %p43 = scmp.eq.s32.totalorder %s15, 1
      %p44 = por %p42, %p43
      %p45 = scmp.ne.s32.totalorder %s37, %s40
      %p46 = scmp.eq.s32.totalorder %s15, 0
      %p47 = por %p45, %p46
      %p48 = scmp.ne.s32.totalorder %s37, %s40
      %p49 = scmp.eq.s32.totalorder %s20, 1
      %p50 = por %p48, %p49
      %p51 = scmp.ne.s32.totalorder %s40, %s41
      %p52 = scmp.eq.s32.totalorder %s20, 0
      %p53 = por %p51, %p52
      %p54 = scmp.ne.s32.totalorder %s40, %s41
      %p55 = scmp.eq.s32.totalorder %s21, 1
      %p56 = por %p54, %p55
      %p58 = scmp.ne.s32.totalorder %s41, %s57
      %p59 = scmp.eq.s32.totalorder %s21, 0
      %p60 = por %p58, %p59
      %s61 = ssub.s32 %s23, %s30
      %p62 = scmp.eq.s32.totalorder %s61, 0
      %s64 = sadd.s32 %s63, 1
      %s65 = scalar_select %p62, %s63, %s64
      %p68 = pneg %p62
      %p69 = scmp.eq.s32.totalorder %s15, 1
      %p70 = por %p68, %p69
      %p71 = scmp.ne.s32.totalorder %s63, %s66
      %p72 = scmp.eq.s32.totalorder %s15, 0
      %p73 = por %p71, %p72
      %p74 = scmp.ne.s32.totalorder %s63, %s66
      %p75 = scmp.eq.s32.totalorder %s20, 1
      %p76 = por %p74, %p75
      %p77 = scmp.ne.s32.totalorder %s66, %s67
      %p78 = scmp.eq.s32.totalorder %s20, 0
      %p79 = por %p77, %p78
      %p80 = scmp.ne.s32.totalorder %s66, %s67
      %p81 = scmp.eq.s32.totalorder %s21, 1
      %p82 = por %p80, %p81
      %p84 = scmp.ne.s32.totalorder %s67, %s83
      %p85 = scmp.eq.s32.totalorder %s21, 0
      %p86 = por %p84, %p85
      %s87 = ssub.s32 %s23, %s30
      %p88 = scmp.eq.s32.totalorder %s87, 0
      %s90 = sadd.s32 %s89, 1
      %s91 = scalar_select %p88, %s89, %s90
      %p94 = pneg %p88
      %p95 = scmp.eq.s32.totalorder %s15, 1
      %p96 = por %p94, %p95
      %p97 = scmp.ne.s32.totalorder %s89, %s92
      %p98 = scmp.eq.s32.totalorder %s15, 0
      %p99 = por %p97, %p98
      %p100 = scmp.ne.s32.totalorder %s89, %s92
      %p101 = scmp.eq.s32.totalorder %s20, 1
      %p102 = por %p100, %p101
      %p103 = scmp.ne.s32.totalorder %s92, %s93
      %p104 = scmp.eq.s32.totalorder %s20, 0
      %p105 = por %p103, %p104
      %p106 = scmp.ne.s32.totalorder %s92, %s93
      %p107 = scmp.eq.s32.totalorder %s21, 1
      %p108 = por %p106, %p107
      %p110 = scmp.ne.s32.totalorder %s93, %s109
      %p111 = scmp.eq.s32.totalorder %s21, 0
      %p112 = por %p110, %p111
      %s113 = ssub.s32 %s23, %s30
      %p114 = scmp.eq.s32.totalorder %s113, 0
      %s116 = sadd.s32 %s115, 1
      %s117 = scalar_select %p114, %s115, %s116
      %p120 = pneg %p114
      %p121 = scmp.eq.s32.totalorder %s15, 1
      %p122 = por %p120, %p121
      %p123 = scmp.ne.s32.totalorder %s115, %s118
      %p124 = scmp.eq.s32.totalorder %s15, 0
      %p125 = por %p123, %p124
      %p126 = scmp.ne.s32.totalorder %s115, %s118
      %p127 = scmp.eq.s32.totalorder %s20, 1
      %p128 = por %p126, %p127
      %p129 = scmp.ne.s32.totalorder %s118, %s119
      %p130 = scmp.eq.s32.totalorder %s20, 0
      %p131 = por %p129, %p130
      %p132 = scmp.ne.s32.totalorder %s118, %s119
      %p133 = scmp.eq.s32.totalorder %s21, 1
      %p134 = por %p132, %p133
      %p136 = scmp.ne.s32.totalorder %s119, %s135
      %p137 = scmp.eq.s32.totalorder %s21, 0
      %p138 = por %p136, %p137
      %s140 = sadd.s32 %s139, 1
      %p143 = scmp.eq.s32.totalorder %s15, 1
      %p144 = scmp.ne.s32.totalorder %s139, %s141
      %p145 = scmp.eq.s32.totalorder %s15, 0
      %p146 = por %p144, %p145
      %p147 = scmp.ne.s32.totalorder %s139, %s141
      %p148 = scmp.eq.s32.totalorder %s20, 1
      %p149 = por %p147, %p148
      %p150 = scmp.ne.s32.totalorder %s141, %s142
      %p151 = scmp.eq.s32.totalorder %s20, 0
      %p152 = por %p150, %p151
      %p153 = scmp.ne.s32.totalorder %s141, %s142
      %p154 = scmp.eq.s32.totalorder %s21, 1
      %p155 = por %p153, %p154
      %p157 = scmp.ne.s32.totalorder %s142, %s156
      %p158 = scmp.eq.s32.totalorder %s21, 0
      %p159 = por %p157, %p158
      %s160 = ssub.s32 %s22, %s34
      %p161 = scmp.eq.s32.totalorder %s160, 0
      %s163 = sadd.s32 %s162, 1
      %s164 = scalar_select %p161, %s162, %s163
      %p167 = pneg %p161
      %p168 = scmp.eq.s32.totalorder %s15, 1
      %p169 = por %p167, %p168
      %p170 = scmp.ne.s32.totalorder %s162, %s165
      %p171 = scmp.eq.s32.totalorder %s15, 0
      %p172 = por %p170, %p171
      %p173 = scmp.ne.s32.totalorder %s162, %s165
      %p174 = scmp.eq.s32.totalorder %s20, 1
      %p175 = por %p173, %p174
      %p176 = scmp.ne.s32.totalorder %s165, %s166
      %p177 = scmp.eq.s32.totalorder %s20, 0
      %p178 = por %p176, %p177
      %p179 = scmp.ne.s32.totalorder %s165, %s166
      %p180 = scmp.eq.s32.totalorder %s21, 1
      %p181 = por %p179, %p180
      %p183 = scmp.ne.s32.totalorder %s166, %s182
      %p184 = scmp.eq.s32.totalorder %s21, 0
      %p185 = por %p183, %p184
      %p186 = scmp.le.s32.totalorder 1, %s15
      %p187 = scmp.lt.s32.totalorder %s15, 3
      %p188 = pnand %p186, %p187
      %p189 = pneg %p188
      // Predicated region
      $region9: #{mlp_forward.1} parent=5 // pred_check
        _
      $region10: #{mlp_forward.1} parent=5 // pred_check_branch
        %191 = sbr.rel (%p188) target = $region12
      $region11: #{mlp_forward.1} parent=5 // pred_region
        %s192 = ssub.s32 %s15, 1
        // Predicated region
        $region13: #{mlp_forward.1} parent=11 // pred_check
          %p193 = pneg %p79
        $region14: #{mlp_forward.1} parent=11 // pred_check_branch
          %195 = sbr.rel (%p193) target = $region16
        $region15: #{mlp_forward.1} parent=11 // pred_region
          %s196 = smul.u32 2, %s25
          %s198 = ssub.s32 2048, 2048
          %199 = vsyncadd [#allocation6], %s198
          %s200 = smul.addr %s196, 128
          %s201 = scalar_lea.hbm %s1, %s200
          %s202 = sshll.u32 [#allocation5], 4
          %s203 = int_to_ptr.vmem [resolvable:$true] %s202
          %208 = dma.hbm_to_vmem [thread:$0]  %s201, 2048, %s203, [#allocation6], 256, 256, 16
        $region16: #{mlp_forward.1} parent=11 // pred_fallthru
          _
        // Predicated region
        $region17: #{mlp_forward.1} parent=11 // pred_check
          %p209 = pneg %p105
        $region18: #{mlp_forward.1} parent=11 // pred_check_branch
          %211 = sbr.rel (%p209) target = $region20
        $region19: #{mlp_forward.1} parent=11 // pred_region
          %s212 = smul.u32 2, %s25
          %p213 = scmp.lt.s32.totalorder %s212, 1
          %s214 = scalar_select %p213, %s212, 1
          %s215 = scalar_lea.vmem %s2, %s214
          %s216 = smul.u32 2, %s25
        $region20: #{mlp_forward.1} parent=11 // pred_fallthru
          _
        // Predicated region
        $region21: #{mlp_forward.1} parent=11 // pred_check
          %p217 = pneg %p131
        $region22: #{mlp_forward.1} parent=11 // pred_check_branch
          %219 = sbr.rel (%p217) target = $region24
        $region23: #{mlp_forward.1} parent=11 // pred_region
          %s220 = smul.u32 32, %s25
          %s222 = ssub.s32 4096, 4096
          %223 = vsyncadd [#allocation6], %s222
          %s224 = smul.addr %s220, 128
          %s225 = scalar_lea.hbm %s3, %s224
          %s226 = sshll.u32 [#allocation7], 4
          %s227 = int_to_ptr.vmem [resolvable:$true] %s226
          %232 = dma.hbm_to_vmem [thread:$0]  %s225, 4096, %s227, [#allocation6], 128, 128, 8
        $region24: #{mlp_forward.1} parent=11 // pred_fallthru
          _
        // Predicated region
        $region25: #{mlp_forward.1} parent=11 // pred_check
          %p233 = pneg %p152
        $region26: #{mlp_forward.1} parent=11 // pred_check_branch
          %235 = sbr.rel (%p233) target = $region28
        $region27: #{mlp_forward.1} parent=11 // pred_region
          _
        $region28: #{mlp_forward.1} parent=11 // pred_fallthru
          _
      $region12: #{mlp_forward.1} parent=5 // pred_fallthru
        _
      %p236 = scmp.lt.s32.totalorder %s15, 2
      // Predicated region
      $region29: #{mlp_forward.1} parent=5 // pred_check
        %p237 = pneg %p236
      $region30: #{mlp_forward.1} parent=5 // pred_check_branch
        %239 = sbr.rel (%p237) target = $region32
      $region31: #{mlp_forward.1} parent=5 // pred_region
        // Predicated region
        $region33: #{mlp_forward.1} parent=31 // pred_check
          %p240 = pneg %p47
        $region34: #{mlp_forward.1} parent=31 // pred_check_branch
          %242 = sbr.rel (%p240) target = $region36
        $region35: #{mlp_forward.1} parent=31 // pred_region
          %s243 = sand.u32 %s37, 1
          %s244 = scalar_lea.sflag [#allocation4], %s243
          %s245 = sand.u32 %s37, 1
          %s246 = smul.addr %s245, 8
          %s247 = scalar_lea.vmem [#allocation3], %s246
          %s249 = ssub.s32 128, 128
          %250 = vsyncadd %s244, %s249
          %s251 = smul.addr %s22, 128
          %s252 = scalar_lea.hbm %s0, %s251
          %s254 = sshll.u32 %s247, 4
          %s255 = int_to_ptr.vmem [resolvable:$true] %s254
          %257 = dma.hbm_to_vmem [thread:$0]  %s252, 128, %s255, %s244
        $region36: #{mlp_forward.1} parent=31 // pred_fallthru
          _
      $region32: #{mlp_forward.1} parent=5 // pred_fallthru
        _
      %p258 = scmp.le.s32.totalorder 1, %s15
      %p259 = scmp.lt.s32.totalorder %s15, 3
      %p260 = pnand %p258, %p259
      %p261 = pneg %p260
      // Predicated region
      $region37: #{mlp_forward.1} parent=5 // pred_check
        _
      $region38: #{mlp_forward.1} parent=5 // pred_check_branch
        %263 = sbr.rel (%p260) target = $region40
      $region39: #{mlp_forward.1} parent=5 // pred_region
        %s264 = ssub.s32 %s15, 1
        %s265 = sand.u32 %s40, 1
        %s266 = scalar_lea.sflag [#allocation4], %s265
        %s267 = sand.u32 %s40, 1
        %s268 = smul.addr %s267, 8
        %s269 = scalar_lea.vmem [#allocation3], %s268
        // Predicated region
        $region41: #{mlp_forward.1} parent=39 // pred_check
          %p270 = pneg %p53
        $region42: #{mlp_forward.1} parent=39 // pred_check_branch
          %272 = sbr.rel (%p270) target = $region44
        $region43: #{mlp_forward.1} parent=39 // pred_region
          %273 = dma.done %s266, 128
        $region44: #{mlp_forward.1} parent=39 // pred_fallthru
          _
        // Predicated region
        $region45: #{mlp_forward.1} parent=39 // pred_check
          %p274 = pneg %p79
        $region46: #{mlp_forward.1} parent=39 // pred_check_branch
          %276 = sbr.rel (%p274) target = $region48
        $region47: #{mlp_forward.1} parent=39 // pred_region
          %277 = dma.done [#allocation6], 2048
        $region48: #{mlp_forward.1} parent=39 // pred_fallthru
          _
        // Predicated region
        $region49: #{mlp_forward.1} parent=39 // pred_check
          %p278 = pneg %p131
        $region50: #{mlp_forward.1} parent=39 // pred_check_branch
          %280 = sbr.rel (%p278) target = $region52
        $region51: #{mlp_forward.1} parent=39 // pred_region
          %281 = dma.done [#allocation6], 4096
        $region52: #{mlp_forward.1} parent=39 // pred_fallthru
          _
        %s282 = sand.u32 %s40, 1
        %s283 = scalar_lea.sflag [#allocation4], %s282
        %s284 = sand.u32 %s40, 1
        %s285 = smul.addr %s284, 8
        %s286 = scalar_lea.vmem [#allocation3], %s285
        %p287 = pneg %p53
        %p288 = pneg %p50
        %p289 = pneg %p79
        %p290 = pneg %p76
        %s291 = smul.u32 2, %s25
        %p292 = scmp.lt.s32.totalorder %s291, 1
        %s293 = scalar_select %p292, %s291, 1
        %s294 = scalar_lea.vmem %s2, %s293
        %p295 = pneg %p105
        %p296 = pneg %p102
        %p297 = pneg %p131
        %p298 = pneg %p128
        %p299 = pneg %p152
        %p300 = pneg %p149
        %p301 = pneg %p178
        %p302 = pneg %p175
        %p303 = scmp.lt.s32.totalorder %s24, 1
        %s304 = scalar_select %p303, %s24, 1
        %s305 = smul.addr %s304, 8
        %s306 = scalar_lea.vmem %s5, %s305
        %s307 = smul.u32 2, %s25
        %s308 = smul.u32 2, %s25
        %p309 = scmp.lt.s32.totalorder %s308, 1
        %s310 = scalar_select %p309, %s308, 1
        %s311 = scalar_lea.vmem %s2, %s310
        %s312 = smul.u32 2, %s25
        %s313 = smul.u32 32, %s25
        %p314 = scmp.lt.s32.totalorder %s24, 1
        %s315 = scalar_select %p314, %s24, 1
        %s316 = smul.addr %s315, 8
        %s317 = scalar_lea.vmem %s5, %s316
        %p318 = scmp.eq.s32.totalorder %s25, 0
        // Predicated region
        $region53: #{mlp_forward.1} parent=39 // pred_check
          %p319 = pneg %p318
        $region54: #{mlp_forward.1} parent=39 // pred_check_branch
          %321 = sbr.rel (%p319) target = $region56
        $region55: #{mlp_forward.1} parent=39 // pred_region
          %322 = vst [vmem:[#allocation2] sm:$0xff] 0.0
        $region56: #{mlp_forward.1} parent=39 // pred_fallthru
          _
        %v323 = vld [vmem:[%s269] sm:$0xff]
        %v324 = vld [vmem:[#allocation5] sm:$0xff]
        %v325 = vld [vmem:[#allocation5 + $0x8] sm:$0xff]
        %v326 = vld [vmem:[#allocation5 + $0x10] sm:$0xff]
        %v327 = vld [vmem:[#allocation5 + $0x18] sm:$0xff]
        %v328 = vld [vmem:[#allocation5 + $0x20] sm:$0xff]
        %v329 = vld [vmem:[#allocation5 + $0x28] sm:$0xff]
        %v330 = vld [vmem:[#allocation5 + $0x30] sm:$0xff]
        %v331 = vld [vmem:[#allocation5 + $0x38] sm:$0xff]
        %v332 = vld [vmem:[#allocation5 + $0x40] sm:$0xff]
        %v333 = vld [vmem:[#allocation5 + $0x48] sm:$0xff]
        %v334 = vld [vmem:[#allocation5 + $0x50] sm:$0xff]
        %v335 = vld [vmem:[#allocation5 + $0x58] sm:$0xff]
        %v336 = vld [vmem:[#allocation5 + $0x60] sm:$0xff]
        %v337 = vld [vmem:[#allocation5 + $0x68] sm:$0xff]
        %v338 = vld [vmem:[#allocation5 + $0x70] sm:$0xff]
        %v339 = vld [vmem:[#allocation5 + $0x78] sm:$0xff]
        %v340 = vld [vmem:[%s311] sm:$0x3]
        %v342 = vlaneseq
        %v343 = vshrl.u32 %v342, 7
        %v344 = vsub.s32 0, %v343
        %v345 = vrot.slane %v340, %v344
        %v346 = vlaneseq
        %v347 = vshrl.u32 %v346, 7
        %v348 = vsub.s32 1, %v347
        %v349 = vrot.slane %v340, %v348
        %vm352 = vcmask 523264
        %v354 = vsel %vm352, %v323, 0
        %356 = vmatprep.subr.mxu0 0.0
        %357 = vmatpush1.msra.mxu0 0.0
        %358 = vmatprep.subr.mxu0 0.0
        %359 = vmatpush1.msra.mxu0 0.0
        %360 = vmatprep.subr.mxu0 0.0
        %361 = vmatpush1.msra.mxu0 0.0
        %362 = vmatprep.subr.mxu0 0.0
        %363 = vmatpush1.msra.mxu0 0.0
        %364 = vmatprep.subr.mxu0 0.0
        %365 = vmatpush1.msra.mxu0 0.0
        %366 = vmatprep.subr.mxu0 0.0
        %367 = vmatpush1.msra.mxu0 0.0
        %368 = vmatprep.subr.mxu0 0.0
        %369 = vmatpush1.msra.mxu0 0.0
        %370 = vmatprep.subr.mxu0 0.0
        %371 = vmatpush1.msra.mxu0 0.0
        %372 = vmatprep.subr.mxu0 %v339
        %373 = vmatpush1.msra.mxu0 %v338
        %374 = vmatprep.subr.mxu0 %v337
        %375 = vmatpush1.msra.mxu0 %v336
        %376 = vmatprep.subr.mxu0 %v335
        %377 = vmatpush1.msra.mxu0 %v334
        %378 = vmatprep.subr.mxu0 %v333
        %379 = vmatpush1.msra.mxu0 %v332
        %380 = vmatprep.subr.mxu0 %v331
        %381 = vmatpush1.msra.mxu0 %v330
        %382 = vmatprep.subr.mxu0 %v329
        %383 = vmatpush1.msra.mxu0 %v328
        %384 = vmatprep.subr.mxu0 %v327
        %385 = vmatpush1.msra.mxu0 %v326
        %386 = vmatprep.subr.mxu0 %v325
        %387 = vmatpush1.msra.mxu0 %v324
        %388 = vmatprep.subr.mxu0 0.0
        %389 = vmatpush2.msra.mxu0 0.0
        %390 = vmatprep.subr.mxu0 0.0
        %391 = vmatpush2.msra.mxu0 0.0
        %392 = vmatprep.subr.mxu0 0.0
        %393 = vmatpush2.msra.mxu0 0.0
        %394 = vmatprep.subr.mxu0 0.0
        %395 = vmatpush2.msra.mxu0 0.0
        %396 = vmatprep.subr.mxu0 0.0
        %397 = vmatpush2.msra.mxu0 0.0
        %398 = vmatprep.subr.mxu0 0.0
        %399 = vmatpush2.msra.mxu0 0.0
        %400 = vmatprep.subr.mxu0 0.0
        %401 = vmatpush2.msra.mxu0 0.0
        %402 = vmatprep.subr.mxu0 0.0
        %403 = vmatpush2.msra.mxu0 0.0
        %404 = vmatprep.subr.mxu0 0.0
        %405 = vmatpush2.msra.mxu0 0.0
        %406 = vmatprep.subr.mxu0 0.0
        %407 = vmatpush2.msra.mxu0 0.0
        %408 = vmatprep.subr.mxu0 0.0
        %409 = vmatpush2.msra.mxu0 0.0
        %410 = vmatprep.subr.mxu0 0.0
        %411 = vmatpush2.msra.mxu0 0.0
        %412 = vmatprep.subr.mxu0 0.0
        %413 = vmatpush2.msra.mxu0 0.0
        %414 = vmatprep.subr.mxu0 0.0
        %415 = vmatpush2.msra.mxu0 0.0
        %416 = vmatprep.subr.mxu0 0.0
        %417 = vmatpush2.msra.mxu0 0.0
        %418 = vmatprep.subr.mxu0 0.0
        %419 = vmatpush2.msra.mxu0 0.0
        %420 = vmatprep.mubr.f32.mxu0 0.0
        %421 = vmatmul.mubr.f32.gmra.mxu0 %v354
        %v422 = vpop.f32.mrf.mxu0
        %v423 = vadd.f32 %v345, %v422
        %v424 = vpop.f32.mrf.mxu0
        %v425 = vadd.f32 %v349, %v424
        %426 = vdwg.mxu0
        %v427 = vmul.f32 %v423, 0.5
        %v428 = vmul.f32 %v425, 0.5
        %v429 = vmul.f32 %v423, 0.70710677
        %v430 = vmul.f32 %v425, 0.70710677
        %v431 = verf.f32.pop %v429
        %v432 = verf.f32.pop %v430
        %v433 = vadd.f32 %v431, 1.0
        %v434 = vadd.f32 %v432, 1.0
        %v435 = vmul.f32 %v427, %v433
        %v436 = vmul.f32 %v428, %v434
        %v437 = vld [vmem:[#allocation2] sm:$0xff]
        %v438 = vld [vmem:[#allocation7] sm:$0xff]
        %v439 = vld [vmem:[#allocation7 + $0x8] sm:$0xff]
        %v440 = vld [vmem:[#allocation7 + $0x10] sm:$0xff]
        %v441 = vld [vmem:[#allocation7 + $0x18] sm:$0xff]
        %v442 = vld [vmem:[#allocation7 + $0x20] sm:$0xff]
        %v443 = vld [vmem:[#allocation7 + $0x28] sm:$0xff]
        %v444 = vld [vmem:[#allocation7 + $0x30] sm:$0xff]
        %v445 = vld [vmem:[#allocation7 + $0x38] sm:$0xff]
        %v446 = vld [vmem:[#allocation7 + $0x40] sm:$0xff]
        %v447 = vld [vmem:[#allocation7 + $0x48] sm:$0xff]
        %v448 = vld [vmem:[#allocation7 + $0x50] sm:$0xff]
        %v449 = vld [vmem:[#allocation7 + $0x58] sm:$0xff]
        %v450 = vld [vmem:[#allocation7 + $0x60] sm:$0xff]
        %v451 = vld [vmem:[#allocation7 + $0x68] sm:$0xff]
        %v452 = vld [vmem:[#allocation7 + $0x70] sm:$0xff]
        %v453 = vld [vmem:[#allocation7 + $0x78] sm:$0xff]
        %v454 = vld [vmem:[#allocation7 + $0x80] sm:$0xff]
        %v455 = vld [vmem:[#allocation7 + $0x88] sm:$0xff]
        %v456 = vld [vmem:[#allocation7 + $0x90] sm:$0xff]
        %v457 = vld [vmem:[#allocation7 + $0x98] sm:$0xff]
        %v458 = vld [vmem:[#allocation7 + $0xa0] sm:$0xff]
        %v459 = vld [vmem:[#allocation7 + $0xa8] sm:$0xff]
        %v460 = vld [vmem:[#allocation7 + $0xb0] sm:$0xff]
        %v461 = vld [vmem:[#allocation7 + $0xb8] sm:$0xff]
        %v462 = vld [vmem:[#allocation7 + $0xc0] sm:$0xff]
        %v463 = vld [vmem:[#allocation7 + $0xc8] sm:$0xff]
        %v464 = vld [vmem:[#allocation7 + $0xd0] sm:$0xff]
        %v465 = vld [vmem:[#allocation7 + $0xd8] sm:$0xff]
        %v466 = vld [vmem:[#allocation7 + $0xe0] sm:$0xff]
        %v467 = vld [vmem:[#allocation7 + $0xe8] sm:$0xff]
        %v468 = vld [vmem:[#allocation7 + $0xf0] sm:$0xff]
        %v469 = vld [vmem:[#allocation7 + $0xf8] sm:$0xff]
        %470 = vmatprep.subr.mxu0 0.0
        %471 = vmatpush1.msra.mxu0 %v453
        %472 = vmatprep.subr.mxu0 0.0
        %473 = vmatpush1.msra.mxu0 %v452
        %474 = vmatprep.subr.mxu0 0.0
        %475 = vmatpush1.msra.mxu0 %v451
        %476 = vmatprep.subr.mxu0 0.0
        %477 = vmatpush1.msra.mxu0 %v450
        %478 = vmatprep.subr.mxu0 0.0
        %479 = vmatpush1.msra.mxu0 %v449
        %480 = vmatprep.subr.mxu0 0.0
        %481 = vmatpush1.msra.mxu0 %v448
        %482 = vmatprep.subr.mxu0 0.0
        %483 = vmatpush1.msra.mxu0 %v447
        %484 = vmatprep.subr.mxu0 0.0
        %485 = vmatpush1.msra.mxu0 %v446
        %486 = vmatprep.subr.mxu0 0.0
        %487 = vmatpush1.msra.mxu0 %v445
        %488 = vmatprep.subr.mxu0 0.0
        %489 = vmatpush1.msra.mxu0 %v444
        %490 = vmatprep.subr.mxu0 0.0
        %491 = vmatpush1.msra.mxu0 %v443
        %492 = vmatprep.subr.mxu0 0.0
        %493 = vmatpush1.msra.mxu0 %v442
        %494 = vmatprep.subr.mxu0 0.0
        %495 = vmatpush1.msra.mxu0 %v441
        %496 = vmatprep.subr.mxu0 0.0
        %497 = vmatpush1.msra.mxu0 %v440
        %498 = vmatprep.subr.mxu0 0.0
        %499 = vmatpush1.msra.mxu0 %v439
        %500 = vmatprep.subr.mxu0 0.0
        %501 = vmatpush1.msra.mxu0 %v438
        %502 = vmatprep.subr.mxu0 0.0
        %503 = vmatpush2.msra.mxu0 %v469
        %504 = vmatprep.subr.mxu0 0.0
        %505 = vmatpush2.msra.mxu0 %v468
        %506 = vmatprep.subr.mxu0 0.0
        %507 = vmatpush2.msra.mxu0 %v467
        %508 = vmatprep.subr.mxu0 0.0
        %509 = vmatpush2.msra.mxu0 %v466
        %510 = vmatprep.subr.mxu0 0.0
        %511 = vmatpush2.msra.mxu0 %v465
        %512 = vmatprep.subr.mxu0 0.0
        %513 = vmatpush2.msra.mxu0 %v464
        %514 = vmatprep.subr.mxu0 0.0
        %515 = vmatpush2.msra.mxu0 %v463
        %516 = vmatprep.subr.mxu0 0.0
        %517 = vmatpush2.msra.mxu0 %v462
        %518 = vmatprep.subr.mxu0 0.0
        %519 = vmatpush2.msra.mxu0 %v461
        %520 = vmatprep.subr.mxu0 0.0
        %521 = vmatpush2.msra.mxu0 %v460
        %522 = vmatprep.subr.mxu0 0.0
        %523 = vmatpush2.msra.mxu0 %v459
        %524 = vmatprep.subr.mxu0 0.0
        %525 = vmatpush2.msra.mxu0 %v458
        %526 = vmatprep.subr.mxu0 0.0
        %527 = vmatpush2.msra.mxu0 %v457
        %528 = vmatprep.subr.mxu0 0.0
        %529 = vmatpush2.msra.mxu0 %v456
        %530 = vmatprep.subr.mxu0 0.0
        %531 = vmatpush2.msra.mxu0 %v455
        %532 = vmatprep.subr.mxu0 0.0
        %533 = vmatpush2.msra.mxu0 %v454
        %534 = vmatprep.mubr.f32.mxu0 %v436
        %535 = vmatmul.mubr.f32.gmra.mxu0 %v435
        %v536 = vpop.f32.mrf.mxu0
        %v537 = vadd.f32 0.0, %v536
        %v538 = vpop.f32.mrf.mxu0
        %539 = vdwg.mxu0
        %v540 = vadd.f32 %v437, %v537
        %541 = vst [vmem:[#allocation2] sm:$0xff] %v540
        // Predicated region
        $region57: #{mlp_forward.1} parent=39 // pred_check
          %p542 = pneg %p318
        $region58: #{mlp_forward.1} parent=39 // pred_check_branch
          %544 = sbr.rel (%p542) target = $region60
        $region59: #{mlp_forward.1} parent=39 // pred_region
          %v545 = vld [vmem:[#allocation2] sm:$0xff]
          %v546 = vld [vmem:[%s4] sm:$0x1]
          %v548 = vlaneseq
          %v549 = vshrl.u32 %v548, 7
          %v550 = vsub.s32 0, %v549
          %v551 = vrot.slane %v546, %v550
          %v553 = vadd.f32 %v545, %v551
          %554 = vst [vmem:[%s317] sm:$0xff] %v553
        $region60: #{mlp_forward.1} parent=39 // pred_fallthru
          _
        %p555 = scmp.lt.s32.totalorder %s24, 1
        %s556 = scalar_select %p555, %s24, 1
        %s557 = smul.addr %s556, 8
        %s558 = scalar_lea.vmem %s5, %s557
        // Predicated region
        $region61: #{mlp_forward.1} parent=39 // pred_check
          %p559 = pneg %p175
        $region62: #{mlp_forward.1} parent=39 // pred_check_branch
          %561 = sbr.rel (%p559) target = $region64
        $region63: #{mlp_forward.1} parent=39 // pred_region
          _
        $region64: #{mlp_forward.1} parent=39 // pred_fallthru
          _
      $region40: #{mlp_forward.1} parent=5 // pred_fallthru
        _
      %p562 = scmp.le.s32.totalorder 2, %s15
      // Predicated region
      $region65: #{mlp_forward.1} parent=5 // pred_check
        %p563 = pneg %p562
      $region66: #{mlp_forward.1} parent=5 // pred_check_branch
        %565 = sbr.rel (%p563) target = $region68
      $region67: #{mlp_forward.1} parent=5 // pred_region
        %s566 = ssub.s32 %s15, 2
        // Predicated region
        $region69: #{mlp_forward.1} parent=67 // pred_check
          %p567 = pneg %p181
        $region70: #{mlp_forward.1} parent=67 // pred_check_branch
          %569 = sbr.rel (%p567) target = $region72
        $region71: #{mlp_forward.1} parent=67 // pred_region
          %p570 = scmp.lt.s32.totalorder %s26, 1
          %s571 = scalar_select %p570, %s26, 1
          %s572 = smul.addr %s571, 8
          %s573 = scalar_lea.vmem %s5, %s572
        $region72: #{mlp_forward.1} parent=67 // pred_fallthru
          _
      $region68: #{mlp_forward.1} parent=5 // pred_fallthru
        _
    $region6: #{mlp_forward.1} parent=1 // loop_footer
      %s19 = sadd.s32 1, %s15
    $region7: #{mlp_forward.1} parent=1 // loop_footer_branch
      %14 = sbr.rel target = $region3
    $region8: #{mlp_forward.1} parent=1 // loop_exit
      _
    %574 = vsyncpa [#allocation4], 1
    %s575 = scalar_lea.sflag [#allocation4], 1
    %576 = vsyncpa %s575, 1
    %577 = vsyncpa [#allocation6], 1

</llo_original>
